<compile_context>
chip_gen: v7x
topology: tpu7x:2x2x1
jax: 0.10.0
libtpu: 0.0.40
codegen_flags: <defaults>
</compile_context>

<pallas_src>
import functools

import jax
import jax.numpy as jnp
from jax.experimental import pallas as pl
from jax.experimental.pallas import tpu as pltpu

LANES = 128
CHUNK_ROWS = 1024                       # inner-loop chunk: ~0.5 MiB live f32 per operand
TARGET_BLOCK_BYTES = 6 * 1024 * 1024    # HBM bytes per input per grid step
VMEM_LIMIT_BYTES = 40 * 1024 * 1024     # 24 MiB double-buffered inputs + headroom


def _round_up(x: int, m: int) -> int:
    return ((x + m - 1) // m) * m


def _sse_partial_kernel(x_ref, y_ref, o_ref, *, block_rows: int,
                        chunk_rows: int, last_tile_rows: int):
    """Writes this tile's (1, 8, 128) partial sum of squared differences."""

    def chunk_sse(r0, valid_rows, acc):
        xs = x_ref[pl.ds(r0, chunk_rows), :].astype(jnp.float32)
        ys = y_ref[pl.ds(r0, chunk_rows), :].astype(jnp.float32)
        d = xs - ys
        sq = d * d
        if valid_rows < chunk_rows:  # static: only the one partial chunk pays this
            rid = jax.lax.broadcasted_iota(jnp.int32, (chunk_rows, LANES), 0)
            sq = jnp.where(rid < valid_rows, sq, 0.0)  # select: OOB NaN/Inf can't leak
        # (chunk_rows, 128) -> (chunk_rows//8, 8, 128); leading-axis sum is pure
        # VPU vreg adds (no cross-lane XLU reduce).
        return acc + jnp.sum(sq.reshape(-1, 8, LANES), axis=0)

    def tile_sse(tile_rows):  # tile_rows is static
        acc = jnp.zeros((8, LANES), jnp.float32)
        nfull = tile_rows // chunk_rows
        if nfull == 1:
            acc = chunk_sse(0, chunk_rows, acc)
        elif nfull > 1:
            acc = jax.lax.fori_loop(
                0, nfull,
                lambda c, a: chunk_sse(
                    pl.multiple_of(c * chunk_rows, chunk_rows), chunk_rows, a),
                acc)
        rem = tile_rows - nfull * chunk_rows
        if rem:  # single masked chunk; rows past the array are never touched otherwise
            acc = chunk_sse(nfull * chunk_rows, rem, acc)
        return acc

    if last_tile_rows == block_rows:
        # No ragged tail anywhere: single unmasked path.
        o_ref[...] = tile_sse(block_rows)[None]
    else:
        last = pl.num_programs(0) - 1

        @pl.when(pl.program_id(0) != last)
        def _():
            o_ref[...] = tile_sse(block_rows)[None]

        @pl.when(pl.program_id(0) == last)
        def _():
            o_ref[...] = tile_sse(last_tile_rows)[None]


def joint_reg_loss(dmaps: jax.Array, gt_dmaps: jax.Array,
                   *, max_block_rows: int | None = None) -> jax.Array:
    """MSELoss(dmaps, gt_dmaps), 'mean' reduction (== JointRegLoss.forward)."""
    assert dmaps.shape == gt_dmaps.shape, "shapes must match"
    n = dmaps.size
    if n == 0:
        return jnp.float32(jnp.nan)  # matches torch.nn.MSELoss on empty input

    x = dmaps.reshape(-1)
    y = gt_dmaps.reshape(-1)

    rows = n // LANES
    rem = n - rows * LANES

    # < 128-element tail handled in the wrapper: no jnp.pad round-trip of the
    # full arrays.  (Common shapes have n % 128 == 0 -> pure metadata reshape.)
    tail_sse = jnp.float32(0.0)
    if rem:
        xt = x[rows * LANES:].astype(jnp.float32)
        yt = y[rows * LANES:].astype(jnp.float32)
        tail_sse = jnp.sum((xt - yt) ** 2)
        if rows:
            # TODO(synk): XLA may materialize this prefix slice; a flat 1-D
            # BlockSpec + flat-index mask would avoid it for n % 128 != 0 too.
            x = x[:rows * LANES]
            y = y[:rows * LANES]

    if rows == 0:
        return tail_sse / jnp.float32(n)

    x2 = x.reshape(rows, LANES)
    y2 = y.reshape(rows, LANES)

    it_min = min(dmaps.dtype.itemsize, gt_dmaps.dtype.itemsize)
    it_max = max(dmaps.dtype.itemsize, gt_dmaps.dtype.itemsize)
    # Sublane group required by the *narrowest* (most tightly packed) dtype.
    sub = {4: 8, 2: 16, 1: 32}.get(it_min, 8)

    # Dtype-aware tile cap: ~6 MiB of HBM bytes per (widest) input per step.
    max_rows = max_block_rows or (TARGET_BLOCK_BYTES // (LANES * it_max))
    max_rows = max(CHUNK_ROWS, (max_rows // CHUNK_ROWS) * CHUNK_ROWS)

    if rows <= CHUNK_ROWS:
        block_rows = _round_up(rows, sub)   # single tile, single chunk
        num_tiles = 1
    else:
        num_tiles = pl.cdiv(rows, max_rows)
        if num_tiles > 1:
            num_tiles += num_tiles % 2      # even tile count -> balanced dual-TC split
        block_rows = _round_up(pl.cdiv(rows, num_tiles), CHUNK_ROWS)
        num_tiles = pl.cdiv(rows, block_rows)  # never emit a fully out-of-bounds tile

    chunk_rows = min(CHUNK_ROWS, block_rows)
    assert block_rows % chunk_rows == 0 and block_rows % sub == 0
    last_tile_rows = rows - (num_tiles - 1) * block_rows

    kernel = functools.partial(
        _sse_partial_kernel, block_rows=block_rows, chunk_rows=chunk_rows,
        last_tile_rows=last_tile_rows)

    partials = pl.pallas_call(
        kernel,
        out_shape=jax.ShapeDtypeStruct((num_tiles, 8, LANES), jnp.float32),
        grid_spec=pltpu.PrefetchScalarGridSpec(
            num_scalar_prefetch=0,
            grid=(num_tiles,),
            in_specs=[
                pl.BlockSpec((block_rows, LANES), lambda i: (i, 0)),
                pl.BlockSpec((block_rows, LANES), lambda i: (i, 0)),
            ],
            out_specs=pl.BlockSpec((1, 8, LANES), lambda i: (i, 0, 0)),
        ),
        compiler_params=pltpu.CompilerParams(
            # Independent per-tile partial sums -> safe to shard across cores.
            dimension_semantics=("parallel",),
            vmem_limit_bytes=VMEM_LIMIT_BYTES,
        ),
    )(x2, y2)

    # Tiny finish: reduce the per-tile (8,128) partials, add the tail, divide.
    return (jnp.sum(partials) + tail_sse) / jnp.float32(n)


if __name__ == "__main__":
    key = jax.random.PRNGKey(0)
    k1, k2, k3, k4, k5, k6 = jax.random.split(key, 6)

    # Small shapes consistent with density-map regression: (B, C, H, W).
    dmaps = jax.random.normal(k1, (2, 4, 16, 16), dtype=jnp.float32)
    gt_dmaps = jax.random.normal(k2, (2, 4, 16, 16), dtype=jnp.float32)
    loss = jax.block_until_ready(joint_reg_loss(dmaps, gt_dmaps))
    ref = jnp.mean((dmaps - gt_dmaps) ** 2)
    assert jnp.allclose(loss, ref, rtol=1e-5, atol=1e-6), (loss, ref)

    # Single-tile, multi-chunk, ragged (masked final chunk) path.
    a = jax.random.normal(k3, (2, 4, 260, 256), dtype=jnp.float32)  # rows = 4160
    b = jax.random.normal(k4, (2, 4, 260, 256), dtype=jnp.float32)
    loss2 = jax.block_until_ready(joint_reg_loss(a, b))
    ref2 = jnp.mean((a - b) ** 2)
    assert jnp.allclose(loss2, ref2, rtol=1e-5, atol=1e-6), (loss2, ref2)

    # Multi-tile path (unmasked interior tiles + masked last tile) via the
    # test-only block cap; exercises the "parallel" grid with >1 step.
    loss3 = jax.block_until_ready(joint_reg_loss(a, b, max_block_rows=2048))
    assert jnp.allclose(loss3, ref2, rtol=1e-5, atol=1e-6), (loss3, ref2)

    # n % 128 != 0: the < 128-element tail is summed in the wrapper (no pad).
    c = jax.random.normal(k5, (3, 5, 7, 11), dtype=jnp.float32)     # n = 1155
    d = jax.random.normal(k6, (3, 5, 7, 11), dtype=jnp.float32)
    loss4 = jax.block_until_ready(joint_reg_loss(c, d))
    ref4 = jnp.mean((c - d) ** 2)
    assert jnp.allclose(loss4, ref4, rtol=1e-5, atol=1e-6), (loss4, ref4)

    # bf16 inputs exercise the dtype-aware tile sizing / wider sublane group.
    ab = a.astype(jnp.bfloat16)
    bb = b.astype(jnp.bfloat16)
    loss5 = jax.block_until_ready(joint_reg_loss(ab, bb))
    ref5 = jnp.mean((ab.astype(jnp.float32) - bb.astype(jnp.float32)) ** 2)
    assert jnp.allclose(loss5, ref5, rtol=1e-3, atol=1e-4), (loss5, ref5)

    print("KERNEL_OK")
</pallas_src>

<mosaic_0001>
module attributes {stable_mosaic.version = 11 : i64} {
  func.func @_sse_partial_kernel(%arg0: i32, %arg1: memref<16x128xf32, #tpu.memory_space<vmem>>, %arg2: memref<16x128xf32, #tpu.memory_space<vmem>>, %arg3: memref<1x8x128xf32, #tpu.memory_space<vmem>>) attributes {dimension_semantics = [#tpu.dimension_semantics<parallel>], iteration_bounds = array<i64: 1>, scalar_prefetch = 0 : i64, scratch_operands = 0 : i64, tpu.core_type = #tpu.core_type<tc>, window_params = [{transform_indices = @transform_0, window_bounds = array<i64: 16, 128>}, {transform_indices = @transform_1, window_bounds = array<i64: 16, 128>}, {transform_indices = @transform_2, window_bounds = array<i64: 1, 8, 128>}]} {
    %cst = arith.constant 0.000000e+00 : f32
    %0 = vector.broadcast %cst : f32 to vector<8x128xf32>
    %c0 = arith.constant 0 : index
    %c0_0 = arith.constant 0 : index
    %1 = vector.load %arg1[%c0, %c0_0] : memref<16x128xf32, #tpu.memory_space<vmem>>, vector<16x128xf32>
    %c0_1 = arith.constant 0 : index
    %c0_2 = arith.constant 0 : index
    %2 = vector.load %arg2[%c0_1, %c0_2] : memref<16x128xf32, #tpu.memory_space<vmem>>, vector<16x128xf32>
    %3 = arith.subf %1, %2 : vector<16x128xf32>
    %4 = arith.mulf %3, %3 : vector<16x128xf32>
    %5 = vector.shape_cast %4 : vector<16x128xf32> to vector<2x8x128xf32>
    %cst_3 = arith.constant dense<0.000000e+00> : vector<8x128xf32>
    %6 = vector.multi_reduction <add>, %5, %cst_3 [0] : vector<2x8x128xf32> to vector<8x128xf32>
    %7 = arith.addf %0, %6 : vector<8x128xf32>
    %8 = vector.shape_cast %7 : vector<8x128xf32> to vector<1x8x128xf32>
    %c0_4 = arith.constant 0 : index
    %c0_5 = arith.constant 0 : index
    %c0_6 = arith.constant 0 : index
    %9 = vector.load %arg3[%c0_4, %c0_5, %c0_6] : memref<1x8x128xf32, #tpu.memory_space<vmem>>, vector<1x8x128xf32>
    tpu.vector_store %arg3[%c0_4, %c0_5, %c0_6], %8 {strides = array<i32>} : memref<1x8x128xf32, #tpu.memory_space<vmem>>, vector<1x8x128xf32>,
    return
  }
  func.func @transform_0(%arg0: i32) -> (i32, i32) {
    %c0_i32 = arith.constant 0 : i32
    %c0_i32_0 = arith.constant 0 : i32
    return %arg0, %c0_i32 : i32, i32
  }
  func.func @transform_1(%arg0: i32) -> (i32, i32) {
    %c0_i32 = arith.constant 0 : i32
    %c0_i32_0 = arith.constant 0 : i32
    return %arg0, %c0_i32 : i32, i32
  }
  func.func @transform_2(%arg0: i32) -> (i32, i32, i32) {
    %c0_i32 = arith.constant 0 : i32
    %c0_i32_0 = arith.constant 0 : i32
    %c0_i32_1 = arith.constant 0 : i32
    return %arg0, %c0_i32, %c0_i32_0 : i32, i32, i32
  }
}

</mosaic_0001>

<llo_original>
// kernel: tpu_custom_call.1
$region0: #{tpu_custom_call.1}
  #allocation0 [shape = 'u32[]', space=smem, size = 0x4, offset = 0x4, fixed_abs, tag = 'smem constant byte address 0x4 - core index']
  #allocation1 [shape = 'u32[144,128]{1,0:T(1,128)}', space=vmem, size = 0x12000, scoped, tag = 'internal scratch']
  %s0 = inlined_call_operand.hbm [shape: f32[16,128], index: 0, kind: input, shape index: {}]
  %s1 = inlined_call_operand.hbm [shape: f32[16,128], index: 1, kind: input, shape index: {}]
  %s2 = inlined_call_operand.hbm [shape: f32[1,8,128], index: 2, kind: output, shape index: {}]
  %s3 = sld [smem:[#allocation0]]
  $region26: #{tpu_custom_call.1} parent=0
    _
  %s5 = ssub.s32 1, %s3
  %s6 = scalar_select 0, %s5, %s3
  $region1: #{tpu_custom_call.1} parent=0
    #allocation2 [shape = 'u8[8192]{0}', space=vmem, size = 0x2000, scoped, tag = 'input window, operand 0, single buffered']
    #allocation3 [shape = 's32[1]{0}', space=sflag, size = 0x4, scoped, tag = 'scoped memory for tpu_custom_call.1']
    #allocation4 [shape = 's32[1]{0}', space=sflag, size = 0x4, scoped, tag = 'scoped memory for tpu_custom_call.1']
    #allocation5 [shape = 'u8[8192]{0}', space=vmem, size = 0x2000, scoped, tag = 'input window, operand 1, single buffered']
    #allocation6 [shape = 's32[1]{0}', space=sflag, size = 0x4, scoped, tag = 'scoped memory for tpu_custom_call.1']
    #allocation7 [shape = 'u8[4096]{0}', space=vmem, size = 0x1000, scoped, tag = 'output window, operand 0, single buffered']
    %7 = vsyncpa [#allocation3], 0
    %8 = vsyncpa [#allocation6], 0
    %9 = vsyncpa [#allocation4], 0
    // Predicated region
    $region2: #{tpu_custom_call.1} parent=1 // pred_check
      _
    $region3: #{tpu_custom_call.1} parent=1 // pred_check_branch
      %11 = sbr.rel (0) target = $region5
    $region4: #{tpu_custom_call.1} parent=1 // pred_region
      %s13 = ssub.s32 256, 256
      %14 = vsyncadd [#allocation3], %s13
      %s15 = sshll.u32 [#allocation2], 4
      %s16 = int_to_ptr.vmem [resolvable:$true] %s15
      %21 = dma.hbm_to_vmem [thread:$0]  %s0, 256, %s16, [#allocation3], 128, 128, 8
    $region5: #{tpu_custom_call.1} parent=1 // pred_fallthru
      _
    // Predicated region
    $region6: #{tpu_custom_call.1} parent=1 // pred_check
      _
    $region7: #{tpu_custom_call.1} parent=1 // pred_check_branch
      %23 = sbr.rel (0) target = $region9
    $region8: #{tpu_custom_call.1} parent=1 // pred_region
      %s25 = ssub.s32 256, 256
      %26 = vsyncadd [#allocation6], %s25
      %s27 = sshll.u32 [#allocation5], 4
      %s28 = int_to_ptr.vmem [resolvable:$true] %s27
      %33 = dma.hbm_to_vmem [thread:$0]  %s1, 256, %s28, [#allocation6], 128, 128, 8
    $region9: #{tpu_custom_call.1} parent=1 // pred_fallthru
      _
    // Predicated region
    $region10: #{tpu_custom_call.1} parent=1 // pred_check
      _
    $region11: #{tpu_custom_call.1} parent=1 // pred_check_branch
      %35 = sbr.rel (0) target = $region13
    $region12: #{tpu_custom_call.1} parent=1 // pred_region
      %36 = dma.done [#allocation3], 256
    $region13: #{tpu_custom_call.1} parent=1 // pred_fallthru
      _
    // Predicated region
    $region14: #{tpu_custom_call.1} parent=1 // pred_check
      _
    $region15: #{tpu_custom_call.1} parent=1 // pred_check_branch
      %38 = sbr.rel (0) target = $region17
    $region16: #{tpu_custom_call.1} parent=1 // pred_region
      %39 = dma.done [#allocation6], 256
    $region17: #{tpu_custom_call.1} parent=1 // pred_fallthru
      _
    %v40 = vld [vmem:[#allocation2] sm:$0xff]
    %v41 = vld [vmem:[#allocation2 + $0x8] sm:$0xff]
    %v42 = vld [vmem:[#allocation5] sm:$0xff]
    %v43 = vld [vmem:[#allocation5 + $0x8] sm:$0xff]
    %v44 = vsub.f32 %v40, %v42
    %v45 = vsub.f32 %v41, %v43
    %v46 = vmul.f32 %v44, %v44
    %v47 = vmul.f32 %v45, %v45
    %v48 = vadd.f32 %v46, %v47
    %v49 = vadd.f32 %v48, 0.0
    %50 = vst [vmem:[#allocation7] sm:$0xff] %v49
    // Predicated region
    $region18: #{tpu_custom_call.1} parent=1 // pred_check
      _
    $region19: #{tpu_custom_call.1} parent=1 // pred_check_branch
      %52 = sbr.rel (0) target = $region21
    $region20: #{tpu_custom_call.1} parent=1 // pred_region
      %s54 = ssub.s32 128, 128
      %55 = vsyncadd [#allocation4], %s54
      %s57 = sshll.u32 [#allocation7], 4
      %s58 = int_to_ptr.vmem [resolvable:$true] %s57
      %60 = dma.vmem_to_hbm [thread:$0]  %s58, 128, %s2, [#allocation4]
    $region21: #{tpu_custom_call.1} parent=1 // pred_fallthru
      _
    // Predicated region
    $region22: #{tpu_custom_call.1} parent=1 // pred_check
      _
    $region23: #{tpu_custom_call.1} parent=1 // pred_check_branch
      %62 = sbr.rel (0) target = $region25
    $region24: #{tpu_custom_call.1} parent=1 // pred_region
      %63 = dma.done [#allocation4], 128
    $region25: #{tpu_custom_call.1} parent=1 // pred_fallthru
      _
    %64 = vsyncpa [#allocation3], 1
    %65 = vsyncpa [#allocation6], 1
    %66 = vsyncpa [#allocation4], 1

</llo_original>
